<compile_context>
chip_gen: v5e
topology: v5e:2x2
jax: 0.10.0
libtpu: 0.0.40
codegen_flags: <defaults>
</compile_context>

<pallas_src>
import functools

import jax
import jax.numpy as jnp
from jax.experimental import pallas as pl
from jax.experimental.pallas import tpu as pltpu

LANE = 128       # pad all feature dims to a multiple of this (lane width)
SUBLANE = 8      # batch tile must be a multiple of this (sublane width)
MAX_TB = 1024    # rows per grid step (amortizes ~0.35us per-step overhead)
MIN_SPLIT = 16   # batch >= this -> force >=2 grid steps (v7x has 2 TensorCores)


def _round_up(n: int, m: int) -> int:
    return ((n + m - 1) // m) * m


def _cdiv(a: int, b: int) -> int:
    return (a + b - 1) // b


def actor_critic_kernel(x_ref, w1_ref, b1_ref, w2_ref, b2_ref, wh_ref, bh_ref,
                        out_ref):
    """One batch tile of the full forward pass.

    x_ref  : [TB, in_pad]          bf16
    w*_ref : [in_pad, out_pad]     bf16  (stored transposed vs. PyTorch)
    b*_ref : [1, out_pad]          f32
    out_ref: [TB, head_pad]        bf16  -> columns are (logits | value | 0-pad)
    """
    x = x_ref[...]

    # base: Linear -> ReLU -> Linear -> ReLU  (bf16 MXU, f32 accumulate/VPU)
    h1 = jnp.dot(x, w1_ref[...], preferred_element_type=jnp.float32) + b1_ref[...]
    h1 = jnp.maximum(h1, 0.0).astype(jnp.bfloat16)
    h2 = jnp.dot(h1, w2_ref[...], preferred_element_type=jnp.float32) + b2_ref[...]
    h2 = jnp.maximum(h2, 0.0).astype(jnp.bfloat16)

    # fused policy+value head -> one lane-dense bf16 output slab
    # (f32 accumulate + f32 bias add, cast to bf16 only for the HBM writeback)
    out_ref[...] = (
        jnp.dot(h2, wh_ref[...], preferred_element_type=jnp.float32) + bh_ref[...]
    ).astype(out_ref.dtype)


def pack_params(params):
    """Pad/fuse the raw f32 PyTorch-layout params once (reuse across calls).

    Input params are [in, out] weights and [1, out] biases. Returns bf16
    zero-padded weights and f32 zero-padded biases with the policy and value
    heads concatenated into a single fused head of width action_dim + 1.
    """
    w1, b1, w2, b2, wp, bp, wv, bv = params
    input_dim, hidden_dim = w1.shape
    action_dim = wp.shape[1]
    del action_dim  # width recovered in the wrapper

    in_pad = _round_up(input_dim, LANE)
    hid_pad = _round_up(hidden_dim, LANE)
    head_pad = _round_up(wp.shape[1] + 1, LANE)

    def pad2d(a, shape, dtype):
        out = jnp.zeros(shape, dtype)
        return out.at[: a.shape[0], : a.shape[1]].set(a.astype(dtype))

    wh = jnp.concatenate([wp, wv], axis=1)  # [hidden, action_dim + 1]
    bh = jnp.concatenate([bp, bv], axis=1)  # [1, action_dim + 1]

    w1p = pad2d(w1, (in_pad, hid_pad), jnp.bfloat16)
    w2p = pad2d(w2, (hid_pad, hid_pad), jnp.bfloat16)
    whp = pad2d(wh, (hid_pad, head_pad), jnp.bfloat16)
    b1p = pad2d(b1, (1, hid_pad), jnp.float32)
    b2p = pad2d(b2, (1, hid_pad), jnp.float32)
    bhp = pad2d(bh, (1, head_pad), jnp.float32)
    return (w1p, b1p, w2p, b2p, whp, bhp)


def actor_critic_forward(x, packed_params, *, action_dim):
    """Forward pass mirroring ActorCriticNet.forward.

    x: [batch, input_dim] (or higher rank; flattened like the PyTorch module).
    Returns (policy_logits [batch, action_dim], value [batch, 1]) in f32.
    """
    if x.ndim > 2:
        x = x.reshape(x.shape[0], -1)

    w1p, b1p, w2p, b2p, whp, bhp = packed_params
    batch, input_dim = x.shape
    in_pad = w1p.shape[0]
    head_pad = whp.shape[1]

    # Balanced batch tiling: n_tiles chosen so no tile exceeds MAX_TB, then the
    # tile size is split evenly (multiple of 8 sublanes).  batch >= MIN_SPLIT
    # always gets >= 2 tiles so v7x's two TensorCores both receive work via the
    # "parallel" grid-axis annotation.
    n_tiles = max(1, _cdiv(batch, MAX_TB))
    if n_tiles == 1 and batch >= MIN_SPLIT:
        n_tiles = 2
    tb = _round_up(_cdiv(batch, n_tiles), SUBLANE)
    batch_pad = n_tiles * tb

    # Skip the wrapper-side pad+cast pass entirely when x is already aligned
    # (bf16, lane-padded input_dim, exact tile multiple of rows) -- it would be
    # a full extra HBM read+write over the batch for a memory-bound kernel.
    if (batch != batch_pad) or (input_dim != in_pad) or (x.dtype != jnp.bfloat16):
        xp = jnp.zeros((batch_pad, in_pad), jnp.bfloat16)
        xp = xp.at[:batch, :input_dim].set(x.astype(jnp.bfloat16))
    else:
        xp = x

    out = pl.pallas_call(
        actor_critic_kernel,
        out_shape=jax.ShapeDtypeStruct((batch_pad, head_pad), jnp.bfloat16),
        grid=(n_tiles,),
        in_specs=[
            # x tile follows the batch grid
            pl.BlockSpec((tb, in_pad), lambda i: (i, 0)),
            # weights / biases: constant index_map -> stay VMEM-resident
            pl.BlockSpec(w1p.shape, lambda i: (0, 0)),
            pl.BlockSpec(b1p.shape, lambda i: (0, 0)),
            pl.BlockSpec(w2p.shape, lambda i: (0, 0)),
            pl.BlockSpec(b2p.shape, lambda i: (0, 0)),
            pl.BlockSpec(whp.shape, lambda i: (0, 0)),
            pl.BlockSpec(bhp.shape, lambda i: (0, 0)),
        ],
        out_specs=pl.BlockSpec((tb, head_pad), lambda i: (i, 0)),
        compiler_params=pltpu.CompilerParams(
            dimension_semantics=("parallel",),  # v7x: shard batch tiles over 2 TCs
        ),
    )(xp, w1p, b1p, w2p, b2p, whp, bhp)

    # Slice the lane-dense bf16 slab back into the module's two f32 outputs.
    logits = out[:batch, :action_dim].astype(jnp.float32)
    value = out[:batch, action_dim:action_dim + 1].astype(jnp.float32)
    return logits, value


def init_params(key, input_dim, hidden_dim, action_dim):
    """Deterministic init matching nn.Linear's uniform(-1/sqrt(fan_in), +)."""
    def linear(key, fan_in, fan_out):
        kw, kb = jax.random.split(key)
        bound = 1.0 / jnp.sqrt(fan_in)
        # stored as [in, out] (transposed vs. PyTorch's [out, in])
        w = jax.random.uniform(kw, (fan_in, fan_out), jnp.float32, -bound, bound)
        b = jax.random.uniform(kb, (1, fan_out), jnp.float32, -bound, bound)
        return w, b

    k1, k2, k3, k4 = jax.random.split(key, 4)
    w1, b1 = linear(k1, input_dim, hidden_dim)
    w2, b2 = linear(k2, hidden_dim, hidden_dim)
    wp, bp = linear(k3, hidden_dim, action_dim)
    wv, bv = linear(k4, hidden_dim, 1)
    return (w1, b1, w2, b2, wp, bp, wv, bv)


if __name__ == "__main__":
    input_dim, hidden_dim, action_dim = 16, 32, 4
    batch = 2  # NOTE: for real rollouts, stack many env steps/actors along
               # batch before calling — at batch=2 the call is pure overhead.

    key = jax.random.PRNGKey(0)
    kx, kp = jax.random.split(key)

    x = jax.random.normal(kx, (batch, input_dim), jnp.float32)
    params = init_params(kp, input_dim, hidden_dim, action_dim)
    packed = pack_params(params)  # pad + fuse heads + cast weights to bf16, once

    forward = jax.jit(functools.partial(actor_critic_forward,
                                        action_dim=action_dim))
    logits, value = forward(x, packed)
    jax.block_until_ready((logits, value))

    assert logits.shape == (batch, action_dim)
    assert value.shape == (batch, 1)

    # Cross-check against a plain-JAX f32 reference of the module's math
    # (loose tolerance: bf16 MXU operands + bf16 output slab).
    # TODO(synk): if the critic value is used as a training target, keep the
    # final head matmul / writeback in f32 for extra precision.
    w1, b1, w2, b2, wp, bp, wv, bv = params
    h = jnp.maximum(x @ w1 + b1, 0.0)
    h = jnp.maximum(h @ w2 + b2, 0.0)
    ref_logits = h @ wp + bp
    ref_value = h @ wv + bv
    assert jnp.allclose(logits, ref_logits, atol=5e-2, rtol=5e-2)
    assert jnp.allclose(value, ref_value, atol=5e-2, rtol=5e-2)

    print("KERNEL_OK")
</pallas_src>

<mosaic_0001>
module attributes {stable_mosaic.version = 11 : i64} {
  func.func @actor_critic_kernel(%arg0: i32, %arg1: memref<8x128xbf16, #tpu.memory_space<vmem>>, %arg2: memref<128x128xbf16, #tpu.memory_space<vmem>>, %arg3: memref<1x128xf32, #tpu.memory_space<vmem>>, %arg4: memref<128x128xbf16, #tpu.memory_space<vmem>>, %arg5: memref<1x128xf32, #tpu.memory_space<vmem>>, %arg6: memref<128x128xbf16, #tpu.memory_space<vmem>>, %arg7: memref<1x128xf32, #tpu.memory_space<vmem>>, %arg8: memref<8x128xbf16, #tpu.memory_space<vmem>>) attributes {dimension_semantics = [#tpu.dimension_semantics<parallel>], iteration_bounds = array<i64: 1>, scalar_prefetch = 0 : i64, scratch_operands = 0 : i64, tpu.core_type = #tpu.core_type<tc>, window_params = [{transform_indices = @transform_0, window_bounds = array<i64: 8, 128>}, {pipeline_mode = #tpu.pipeline_mode<synchronous>, transform_indices = @transform_1, window_bounds = array<i64: 128, 128>}, {pipeline_mode = #tpu.pipeline_mode<synchronous>, transform_indices = @transform_2, window_bounds = array<i64: 1, 128>}, {pipeline_mode = #tpu.pipeline_mode<synchronous>, transform_indices = @transform_3, window_bounds = array<i64: 128, 128>}, {pipeline_mode = #tpu.pipeline_mode<synchronous>, transform_indices = @transform_4, window_bounds = array<i64: 1, 128>}, {pipeline_mode = #tpu.pipeline_mode<synchronous>, transform_indices = @transform_5, window_bounds = array<i64: 128, 128>}, {pipeline_mode = #tpu.pipeline_mode<synchronous>, transform_indices = @transform_6, window_bounds = array<i64: 1, 128>}, {transform_indices = @transform_7, window_bounds = array<i64: 8, 128>}]} {
    %c0 = arith.constant 0 : index
    %c0_0 = arith.constant 0 : index
    %0 = vector.load %arg1[%c0, %c0_0] : memref<8x128xbf16, #tpu.memory_space<vmem>>, vector<8x128xbf16>
    %c0_1 = arith.constant 0 : index
    %c0_2 = arith.constant 0 : index
    %1 = vector.load %arg2[%c0_1, %c0_2] : memref<128x128xbf16, #tpu.memory_space<vmem>>, vector<128x128xbf16>
    %cst = arith.constant dense<0.000000e+00> : vector<8x128xf32>
    %2 = tpu.matmul %0, %1, %cst {dimension_numbers = #tpu.dot_dimension_numbers<[1], [0], [0], [1], [0, 0, 1, 1], [], []>} : vector<8x128xbf16>, vector<128x128xbf16>, vector<8x128xf32> -> vector<8x128xf32>
    %c0_3 = arith.constant 0 : index
    %c0_4 = arith.constant 0 : index
    %3 = vector.load %arg3[%c0_3, %c0_4] : memref<1x128xf32, #tpu.memory_space<vmem>>, vector<1x128xf32>
    %4 = vector.broadcast %3 : vector<1x128xf32> to vector<8x128xf32>
    %5 = arith.addf %2, %4 : vector<8x128xf32>
    %cst_5 = arith.constant 0.000000e+00 : f32
    %6 = vector.broadcast %cst_5 : f32 to vector<8x128xf32>
    %7 = arith.maximumf %5, %6 : vector<8x128xf32>
    %8 = arith.truncf %7 : vector<8x128xf32> to vector<8x128xbf16>
    %c0_6 = arith.constant 0 : index
    %c0_7 = arith.constant 0 : index
    %9 = vector.load %arg4[%c0_6, %c0_7] : memref<128x128xbf16, #tpu.memory_space<vmem>>, vector<128x128xbf16>
    %cst_8 = arith.constant dense<0.000000e+00> : vector<8x128xf32>
    %10 = tpu.matmul %8, %9, %cst_8 {dimension_numbers = #tpu.dot_dimension_numbers<[1], [0], [0], [1], [0, 0, 1, 1], [], []>} : vector<8x128xbf16>, vector<128x128xbf16>, vector<8x128xf32> -> vector<8x128xf32>
    %c0_9 = arith.constant 0 : index
    %c0_10 = arith.constant 0 : index
    %11 = vector.load %arg5[%c0_9, %c0_10] : memref<1x128xf32, #tpu.memory_space<vmem>>, vector<1x128xf32>
    %12 = vector.broadcast %11 : vector<1x128xf32> to vector<8x128xf32>
    %13 = arith.addf %10, %12 : vector<8x128xf32>
    %cst_11 = arith.constant 0.000000e+00 : f32
    %14 = vector.broadcast %cst_11 : f32 to vector<8x128xf32>
    %15 = arith.maximumf %13, %14 : vector<8x128xf32>
    %16 = arith.truncf %15 : vector<8x128xf32> to vector<8x128xbf16>
    %c0_12 = arith.constant 0 : index
    %c0_13 = arith.constant 0 : index
    %17 = vector.load %arg6[%c0_12, %c0_13] : memref<128x128xbf16, #tpu.memory_space<vmem>>, vector<128x128xbf16>
    %cst_14 = arith.constant dense<0.000000e+00> : vector<8x128xf32>
    %18 = tpu.matmul %16, %17, %cst_14 {dimension_numbers = #tpu.dot_dimension_numbers<[1], [0], [0], [1], [0, 0, 1, 1], [], []>} : vector<8x128xbf16>, vector<128x128xbf16>, vector<8x128xf32> -> vector<8x128xf32>
    %c0_15 = arith.constant 0 : index
    %c0_16 = arith.constant 0 : index
    %19 = vector.load %arg7[%c0_15, %c0_16] : memref<1x128xf32, #tpu.memory_space<vmem>>, vector<1x128xf32>
    %20 = vector.broadcast %19 : vector<1x128xf32> to vector<8x128xf32>
    %21 = arith.addf %18, %20 : vector<8x128xf32>
    %22 = arith.truncf %21 : vector<8x128xf32> to vector<8x128xbf16>
    %c0_17 = arith.constant 0 : index
    %c0_18 = arith.constant 0 : index
    %23 = vector.load %arg8[%c0_17, %c0_18] : memref<8x128xbf16, #tpu.memory_space<vmem>>, vector<8x128xbf16>
    tpu.vector_store %arg8[%c0_17, %c0_18], %22 {strides = array<i32>} : memref<8x128xbf16, #tpu.memory_space<vmem>>, vector<8x128xbf16>,
    return
  }
  func.func @transform_0(%arg0: i32) -> (i32, i32) {
    %c0_i32 = arith.constant 0 : i32
    %c0_i32_0 = arith.constant 0 : i32
    return %arg0, %c0_i32 : i32, i32
  }
  func.func @transform_1(%arg0: i32) -> (i32, i32) {
    %c0_i32 = arith.constant 0 : i32
    %c0_i32_0 = arith.constant 0 : i32
    %c0_i32_1 = arith.constant 0 : i32
    return %c0_i32, %c0_i32_0 : i32, i32
  }
  func.func @transform_2(%arg0: i32) -> (i32, i32) {
    %c0_i32 = arith.constant 0 : i32
    %c0_i32_0 = arith.constant 0 : i32
    %c0_i32_1 = arith.constant 0 : i32
    return %c0_i32, %c0_i32_0 : i32, i32
  }
  func.func @transform_3(%arg0: i32) -> (i32, i32) {
    %c0_i32 = arith.constant 0 : i32
    %c0_i32_0 = arith.constant 0 : i32
    %c0_i32_1 = arith.constant 0 : i32
    return %c0_i32, %c0_i32_0 : i32, i32
  }
  func.func @transform_4(%arg0: i32) -> (i32, i32) {
    %c0_i32 = arith.constant 0 : i32
    %c0_i32_0 = arith.constant 0 : i32
    %c0_i32_1 = arith.constant 0 : i32
    return %c0_i32, %c0_i32_0 : i32, i32
  }
  func.func @transform_5(%arg0: i32) -> (i32, i32) {
    %c0_i32 = arith.constant 0 : i32
    %c0_i32_0 = arith.constant 0 : i32
    %c0_i32_1 = arith.constant 0 : i32
    return %c0_i32, %c0_i32_0 : i32, i32
  }
  func.func @transform_6(%arg0: i32) -> (i32, i32) {
    %c0_i32 = arith.constant 0 : i32
    %c0_i32_0 = arith.constant 0 : i32
    %c0_i32_1 = arith.constant 0 : i32
    return %c0_i32, %c0_i32_0 : i32, i32
  }
  func.func @transform_7(%arg0: i32) -> (i32, i32) {
    %c0_i32 = arith.constant 0 : i32
    %c0_i32_0 = arith.constant 0 : i32
    return %arg0, %c0_i32 : i32, i32
  }
}

</mosaic_0001>

<llo_original>
// kernel: actor_critic_forward.1
$region0: #{actor_critic_forward.1}
  #allocation0 [shape = 'u32[]', space=smem, size = 0x4, offset = 0x4, fixed_abs, tag = 'smem constant byte address 0x4 - core index']
  #allocation1 [shape = 'u32[72,128]{1,0:T(1,128)}', space=vmem, size = 0x9000, scoped, tag = 'internal scratch']
  %s0 = inlined_call_operand.vmem [shape: bf16[8,128], index: 0, kind: input, shape index: {}]
  %s1 = inlined_call_operand.hbm [shape: bf16[128,128], index: 1, kind: input, shape index: {}]
  %s2 = inlined_call_operand.vmem [shape: f32[1,128], index: 2, kind: input, shape index: {}]
  %s3 = inlined_call_operand.hbm [shape: bf16[128,128], index: 3, kind: input, shape index: {}]
  %s4 = inlined_call_operand.vmem [shape: f32[1,128], index: 4, kind: input, shape index: {}]
  %s5 = inlined_call_operand.hbm [shape: bf16[128,128], index: 5, kind: input, shape index: {}]
  %s6 = inlined_call_operand.vmem [shape: f32[1,128], index: 6, kind: input, shape index: {}]
  %s7 = inlined_call_operand.vmem [shape: bf16[8,128], index: 7, kind: output, shape index: {}]
  %s8 = sld [smem:[#allocation0]]
  $region50: #{actor_critic_forward.1} parent=0
    _
  %s10 = ssub.s32 1, %s8
  %s11 = scalar_select 0, %s10, %s8
  $region1: #{actor_critic_forward.1} parent=0
    #allocation2 [shape = 'u8[32768]{0}', space=vmem, size = 0x8000, scoped, tag = 'input window, operand 1, single buffered']
    #allocation3 [shape = 's32[1]{0}', space=sflag, size = 0x4, scoped, tag = 'scoped memory for actor_critic_forward.1']
    #allocation4 [shape = 'u8[32768]{0}', space=vmem, size = 0x8000, scoped, tag = 'input window, operand 3, single buffered']
    #allocation5 [shape = 's32[1]{0}', space=sflag, size = 0x4, scoped, tag = 'scoped memory for actor_critic_forward.1']
    #allocation6 [shape = 'u8[32768]{0}', space=vmem, size = 0x8000, scoped, tag = 'input window, operand 5, single buffered']
    %12 = vsyncpa [#allocation3], 0
    %13 = vsyncpa [#allocation5], 0
    // Predicated region
    $region2: #{actor_critic_forward.1} parent=1 // pred_check
      _
    $region3: #{actor_critic_forward.1} parent=1 // pred_check_branch
      %15 = sbr.rel (0) target = $region5
    $region4: #{actor_critic_forward.1} parent=1 // pred_region
      _
    $region5: #{actor_critic_forward.1} parent=1 // pred_fallthru
      _
    // Predicated region
    $region6: #{actor_critic_forward.1} parent=1 // pred_check
      _
    $region7: #{actor_critic_forward.1} parent=1 // pred_check_branch
      %17 = sbr.rel (0) target = $region9
    $region8: #{actor_critic_forward.1} parent=1 // pred_region
      %19 = vsyncadd [#allocation3], 0
      %s20 = sshll.u32 %s1, 4
      %s21 = int_to_ptr.hbm [resolvable:$true] %s20
      %s22 = sshll.u32 [#allocation2], 4
      %s23 = int_to_ptr.vmem [resolvable:$true] %s22
      %28 = dma.hbm_to_vmem [thread:$0]  %s21, 1024, %s23, [#allocation3], 64, 64, 4
    $region9: #{actor_critic_forward.1} parent=1 // pred_fallthru
      _
    // Predicated region
    $region10: #{actor_critic_forward.1} parent=1 // pred_check
      _
    $region11: #{actor_critic_forward.1} parent=1 // pred_check_branch
      %30 = sbr.rel (0) target = $region13
    $region12: #{actor_critic_forward.1} parent=1 // pred_region
      _
    $region13: #{actor_critic_forward.1} parent=1 // pred_fallthru
      _
    // Predicated region
    $region14: #{actor_critic_forward.1} parent=1 // pred_check
      _
    $region15: #{actor_critic_forward.1} parent=1 // pred_check_branch
      %32 = sbr.rel (0) target = $region17
    $region16: #{actor_critic_forward.1} parent=1 // pred_region
      %34 = vsyncadd [#allocation5], 0
      %s35 = sshll.u32 %s3, 4
      %s36 = int_to_ptr.hbm [resolvable:$true] %s35
      %s37 = sshll.u32 [#allocation4], 4
      %s38 = int_to_ptr.vmem [resolvable:$true] %s37
      %43 = dma.hbm_to_vmem [thread:$0]  %s36, 1024, %s38, [#allocation5], 64, 64, 4
    $region17: #{actor_critic_forward.1} parent=1 // pred_fallthru
      _
    // Predicated region
    $region18: #{actor_critic_forward.1} parent=1 // pred_check
      _
    $region19: #{actor_critic_forward.1} parent=1 // pred_check_branch
      %45 = sbr.rel (0) target = $region21
    $region20: #{actor_critic_forward.1} parent=1 // pred_region
      _
    $region21: #{actor_critic_forward.1} parent=1 // pred_fallthru
      _
    // Predicated region
    $region22: #{actor_critic_forward.1} parent=1 // pred_check
      _
    $region23: #{actor_critic_forward.1} parent=1 // pred_check_branch
      %47 = sbr.rel (0) target = $region25
    $region24: #{actor_critic_forward.1} parent=1 // pred_region
      %49 = vsyncadd [#allocation5], 0
      %s50 = sshll.u32 %s5, 4
      %s51 = int_to_ptr.hbm [resolvable:$true] %s50
      %s52 = sshll.u32 [#allocation6], 4
      %s53 = int_to_ptr.vmem [resolvable:$true] %s52
      %58 = dma.hbm_to_vmem [thread:$0]  %s51, 1024, %s53, [#allocation5], 64, 64, 4
    $region25: #{actor_critic_forward.1} parent=1 // pred_fallthru
      _
    // Predicated region
    $region26: #{actor_critic_forward.1} parent=1 // pred_check
      _
    $region27: #{actor_critic_forward.1} parent=1 // pred_check_branch
      %60 = sbr.rel (0) target = $region29
    $region28: #{actor_critic_forward.1} parent=1 // pred_region
      _
    $region29: #{actor_critic_forward.1} parent=1 // pred_fallthru
      _
    // Predicated region
    $region30: #{actor_critic_forward.1} parent=1 // pred_check
      _
    $region31: #{actor_critic_forward.1} parent=1 // pred_check_branch
      %62 = sbr.rel (0) target = $region33
    $region32: #{actor_critic_forward.1} parent=1 // pred_region
      %64 = dma.done [#allocation3], 1024
    $region33: #{actor_critic_forward.1} parent=1 // pred_fallthru
      _
    // Predicated region
    $region34: #{actor_critic_forward.1} parent=1 // pred_check
      _
    $region35: #{actor_critic_forward.1} parent=1 // pred_check_branch
      %66 = sbr.rel (0) target = $region37
    $region36: #{actor_critic_forward.1} parent=1 // pred_region
      %68 = dma.done [#allocation5], 1024
    $region37: #{actor_critic_forward.1} parent=1 // pred_fallthru
      _
    // Predicated region
    $region38: #{actor_critic_forward.1} parent=1 // pred_check
      _
    $region39: #{actor_critic_forward.1} parent=1 // pred_check_branch
      %70 = sbr.rel (0) target = $region41
    $region40: #{actor_critic_forward.1} parent=1 // pred_region
      %72 = dma.done [#allocation5], 1024
    $region41: #{actor_critic_forward.1} parent=1 // pred_fallthru
      _
    %v73 = vld [vmem:[%s0] sm:$0xf]
    %v74 = vld [vmem:[#allocation2] sm:$0xf]
    %v75 = vld [vmem:[#allocation2 + $0x4] sm:$0xf]
    %v76 = vld [vmem:[#allocation2 + $0x8] sm:$0xf]
    %v77 = vld [vmem:[#allocation2 + $0xc] sm:$0xf]
    %v78 = vld [vmem:[#allocation2 + $0x10] sm:$0xf]
    %v79 = vld [vmem:[#allocation2 + $0x14] sm:$0xf]
    %v80 = vld [vmem:[#allocation2 + $0x18] sm:$0xf]
    %v81 = vld [vmem:[#allocation2 + $0x1c] sm:$0xf]
    %v82 = vld [vmem:[#allocation2 + $0x20] sm:$0xf]
    %v83 = vld [vmem:[#allocation2 + $0x24] sm:$0xf]
    %v84 = vld [vmem:[#allocation2 + $0x28] sm:$0xf]
    %v85 = vld [vmem:[#allocation2 + $0x2c] sm:$0xf]
    %v86 = vld [vmem:[#allocation2 + $0x30] sm:$0xf]
    %v87 = vld [vmem:[#allocation2 + $0x34] sm:$0xf]
    %v88 = vld [vmem:[#allocation2 + $0x38] sm:$0xf]
    %v89 = vld [vmem:[#allocation2 + $0x3c] sm:$0xf]
    %v90 = vld [vmem:[%s2] sm:$0x1]
    %v92 = vperm.slane %v90, 0
    %v110 = vunpack.c.l.b16 %v74
    %v111 = vunpack.c.l.b16 %v75
    %v112 = vunpack.c.l.b16 %v76
    %v113 = vunpack.c.l.b16 %v77
    %v114 = vunpack.c.l.b16 %v78
    %v115 = vunpack.c.l.b16 %v79
    %v116 = vunpack.c.l.b16 %v80
    %v117 = vunpack.c.l.b16 %v81
    %v118 = vunpack.c.l.b16 %v82
    %v119 = vunpack.c.l.b16 %v83
    %v120 = vunpack.c.l.b16 %v84
    %v121 = vunpack.c.l.b16 %v85
    %v122 = vunpack.c.l.b16 %v86
    %v123 = vunpack.c.l.b16 %v87
    %v124 = vunpack.c.l.b16 %v88
    %v125 = vunpack.c.l.b16 %v89
    %v126 = vpack.c.b16 %v111, %v110
    %v127 = vpack.c.b16 %v113, %v112
    %v128 = vpack.c.b16 %v115, %v114
    %v129 = vpack.c.b16 %v117, %v116
    %v130 = vpack.c.b16 %v119, %v118
    %v131 = vpack.c.b16 %v121, %v120
    %v132 = vpack.c.b16 %v123, %v122
    %v133 = vpack.c.b16 %v125, %v124
    %142 = vmatpush.bf16.msra.mxu0 %v133
    %143 = vmatpush.bf16.msra.mxu0 %v132
    %144 = vmatpush.bf16.msra.mxu0 %v131
    %145 = vmatpush.bf16.msra.mxu0 %v130
    %146 = vmatpush.bf16.msra.mxu0 %v129
    %147 = vmatpush.bf16.msra.mxu0 %v128
    %148 = vmatpush.bf16.msra.mxu0 %v127
    %149 = vmatpush.bf16.msra.mxu0 %v126
    %150 = vmatmul.bf16.gmra.mxu0 %v73
    %v151 = vpop.f32.mrf.mxu0
    %v152 = vadd.f32 %v92, %v151
    %v153 = vpop.f32.mrf.mxu0
    %154 = vdwg.mxu0
    %v155 = vmax.f32 %v152, 0.0
    %v156 = vpack.c.bf16 %v155, %v155
    %v157 = vld [vmem:[#allocation4] sm:$0xf]
    %v158 = vld [vmem:[#allocation4 + $0x4] sm:$0xf]
    %v159 = vld [vmem:[#allocation4 + $0x8] sm:$0xf]
    %v160 = vld [vmem:[#allocation4 + $0xc] sm:$0xf]
    %v161 = vld [vmem:[#allocation4 + $0x10] sm:$0xf]
    %v162 = vld [vmem:[#allocation4 + $0x14] sm:$0xf]
    %v163 = vld [vmem:[#allocation4 + $0x18] sm:$0xf]
    %v164 = vld [vmem:[#allocation4 + $0x1c] sm:$0xf]
    %v165 = vld [vmem:[#allocation4 + $0x20] sm:$0xf]
    %v166 = vld [vmem:[#allocation4 + $0x24] sm:$0xf]
    %v167 = vld [vmem:[#allocation4 + $0x28] sm:$0xf]
    %v168 = vld [vmem:[#allocation4 + $0x2c] sm:$0xf]
    %v169 = vld [vmem:[#allocation4 + $0x30] sm:$0xf]
    %v170 = vld [vmem:[#allocation4 + $0x34] sm:$0xf]
    %v171 = vld [vmem:[#allocation4 + $0x38] sm:$0xf]
    %v172 = vld [vmem:[#allocation4 + $0x3c] sm:$0xf]
    %v173 = vld [vmem:[%s4] sm:$0x1]
    %v175 = vperm.slane %v173, 0
    %v193 = vunpack.c.l.b16 %v157
    %v194 = vunpack.c.l.b16 %v158
    %v195 = vunpack.c.l.b16 %v159
    %v196 = vunpack.c.l.b16 %v160
    %v197 = vunpack.c.l.b16 %v161
    %v198 = vunpack.c.l.b16 %v162
    %v199 = vunpack.c.l.b16 %v163
    %v200 = vunpack.c.l.b16 %v164
    %v201 = vunpack.c.l.b16 %v165
    %v202 = vunpack.c.l.b16 %v166
    %v203 = vunpack.c.l.b16 %v167
    %v204 = vunpack.c.l.b16 %v168
    %v205 = vunpack.c.l.b16 %v169
    %v206 = vunpack.c.l.b16 %v170
    %v207 = vunpack.c.l.b16 %v171
    %v208 = vunpack.c.l.b16 %v172
    %v209 = vpack.c.b16 %v194, %v193
    %v210 = vpack.c.b16 %v196, %v195
    %v211 = vpack.c.b16 %v198, %v197
    %v212 = vpack.c.b16 %v200, %v199
    %v213 = vpack.c.b16 %v202, %v201
    %v214 = vpack.c.b16 %v204, %v203
    %v215 = vpack.c.b16 %v206, %v205
    %v216 = vpack.c.b16 %v208, %v207
    %225 = vmatpush.bf16.msra.mxu0 %v216
    %226 = vmatpush.bf16.msra.mxu0 %v215
    %227 = vmatpush.bf16.msra.mxu0 %v214
    %228 = vmatpush.bf16.msra.mxu0 %v213
    %229 = vmatpush.bf16.msra.mxu0 %v212
    %230 = vmatpush.bf16.msra.mxu0 %v211
    %231 = vmatpush.bf16.msra.mxu0 %v210
    %232 = vmatpush.bf16.msra.mxu0 %v209
    %233 = vmatmul.bf16.gmra.mxu0 %v156
    %v234 = vpop.f32.mrf.mxu0
    %v235 = vadd.f32 %v175, %v234
    %v236 = vpop.f32.mrf.mxu0
    %237 = vdwg.mxu0
    %v238 = vmax.f32 %v235, 0.0
    %v239 = vpack.c.bf16 %v238, %v238
    %v240 = vld [vmem:[#allocation6] sm:$0xf]
    %v241 = vld [vmem:[#allocation6 + $0x4] sm:$0xf]
    %v242 = vld [vmem:[#allocation6 + $0x8] sm:$0xf]
    %v243 = vld [vmem:[#allocation6 + $0xc] sm:$0xf]
    %v244 = vld [vmem:[#allocation6 + $0x10] sm:$0xf]
    %v245 = vld [vmem:[#allocation6 + $0x14] sm:$0xf]
    %v246 = vld [vmem:[#allocation6 + $0x18] sm:$0xf]
    %v247 = vld [vmem:[#allocation6 + $0x1c] sm:$0xf]
    %v248 = vld [vmem:[#allocation6 + $0x20] sm:$0xf]
    %v249 = vld [vmem:[#allocation6 + $0x24] sm:$0xf]
    %v250 = vld [vmem:[#allocation6 + $0x28] sm:$0xf]
    %v251 = vld [vmem:[#allocation6 + $0x2c] sm:$0xf]
    %v252 = vld [vmem:[#allocation6 + $0x30] sm:$0xf]
    %v253 = vld [vmem:[#allocation6 + $0x34] sm:$0xf]
    %v254 = vld [vmem:[#allocation6 + $0x38] sm:$0xf]
    %v255 = vld [vmem:[#allocation6 + $0x3c] sm:$0xf]
    %v256 = vld [vmem:[%s6] sm:$0x1]
    %v258 = vperm.slane %v256, 0
    %v276 = vunpack.c.l.b16 %v240
    %v277 = vunpack.c.l.b16 %v241
    %v278 = vunpack.c.l.b16 %v242
    %v279 = vunpack.c.l.b16 %v243
    %v280 = vunpack.c.l.b16 %v244
    %v281 = vunpack.c.l.b16 %v245
    %v282 = vunpack.c.l.b16 %v246
    %v283 = vunpack.c.l.b16 %v247
    %v284 = vunpack.c.l.b16 %v248
    %v285 = vunpack.c.l.b16 %v249
    %v286 = vunpack.c.l.b16 %v250
    %v287 = vunpack.c.l.b16 %v251
    %v288 = vunpack.c.l.b16 %v252
    %v289 = vunpack.c.l.b16 %v253
    %v290 = vunpack.c.l.b16 %v254
    %v291 = vunpack.c.l.b16 %v255
    %v292 = vpack.c.b16 %v277, %v276
    %v293 = vpack.c.b16 %v279, %v278
    %v294 = vpack.c.b16 %v281, %v280
    %v295 = vpack.c.b16 %v283, %v282
    %v296 = vpack.c.b16 %v285, %v284
    %v297 = vpack.c.b16 %v287, %v286
    %v298 = vpack.c.b16 %v289, %v288
    %v299 = vpack.c.b16 %v291, %v290
    %308 = vmatpush.bf16.msra.mxu0 %v299
    %309 = vmatpush.bf16.msra.mxu0 %v298
    %310 = vmatpush.bf16.msra.mxu0 %v297
    %311 = vmatpush.bf16.msra.mxu0 %v296
    %312 = vmatpush.bf16.msra.mxu0 %v295
    %313 = vmatpush.bf16.msra.mxu0 %v294
    %314 = vmatpush.bf16.msra.mxu0 %v293
    %315 = vmatpush.bf16.msra.mxu0 %v292
    %316 = vmatmul.bf16.gmra.mxu0 %v239
    %v317 = vpop.f32.mrf.mxu0
    %v318 = vadd.f32 %v258, %v317
    %v319 = vpop.f32.mrf.mxu0
    %320 = vdwg.mxu0
    %v321 = vpack.c.bf16 %v318, %v318
    %322 = vst [vmem:[%s7] sm:$0xf] %v321
    // Predicated region
    $region42: #{actor_critic_forward.1} parent=1 // pred_check
      _
    $region43: #{actor_critic_forward.1} parent=1 // pred_check_branch
      %324 = sbr.rel (0) target = $region45
    $region44: #{actor_critic_forward.1} parent=1 // pred_region
      _
    $region45: #{actor_critic_forward.1} parent=1 // pred_fallthru
      _
    // Predicated region
    $region46: #{actor_critic_forward.1} parent=1 // pred_check
      _
    $region47: #{actor_critic_forward.1} parent=1 // pred_check_branch
      %326 = sbr.rel (0) target = $region49
    $region48: #{actor_critic_forward.1} parent=1 // pred_region
      _
    $region49: #{actor_critic_forward.1} parent=1 // pred_fallthru
      _
    %327 = vsyncpa [#allocation3], 1
    %328 = vsyncpa [#allocation5], 1

</llo_original>
